<compile_context>
chip_gen: v7x
topology: tpu7x:2x2x1
jax: 0.10.0
libtpu: 0.0.40
codegen_flags: <defaults>
</compile_context>

<pallas_src>
import numpy as np
import jax
import jax.numpy as jnp
from jax import lax
from jax.experimental import pallas as pl
from jax.experimental.pallas import tpu as pltpu


# ---------------------------------------------------------------------------
# Synthetic replacement for get_hierarchy_relations(taxonomic_hierarchy,
# label_map) -- static, __init__-time setup glue in the PyTorch module.
# ---------------------------------------------------------------------------
def get_hierarchy_relations_synthetic(num_labels):
    # parent -> list of children (indices into the label set)
    return {
        0: [2, 3],
        1: [4, 5, 6],
        2: [7],
        3: [],           # empty child list -> skipped (matches reference code)
    }


def _flatten_relations(relations):
    parents, children = [], []
    for p, kids in relations.items():
        for c in kids:
            parents.append(p)
            children.append(c)
    return np.asarray(parents, np.int32), np.asarray(children, np.int32)


# ---------------------------------------------------------------------------
# Pallas kernel: tiled BCE-with-logits partial sums.
# ---------------------------------------------------------------------------
_TM_PREF = 256    # sublane-axis tile (multiple of 8 / 16 for f32 / bf16)
_TN_PREF = 2048   # lane-axis tile (multiple of 128)
# NOTE: on v5e/v6e with many grid steps, TM=512 (and TN=4096 for bf16) with a
# larger vmem_limit amortizes per-step overhead; kept at the v7x-safe size.


def _make_loss_kernel(*, B, N, TM, TN, gm_c, gn_c, acc_rows,
                      need_row_mask, need_col_mask, row_block, col_block):
    need_mask = need_row_mask or need_col_mask

    def loss_kernel(logits_ref, targets_ref, out_ref, acc_ref):
        c = pl.program_id(0)
        i = pl.program_id(1)
        j = pl.program_id(2)

        @pl.when(jnp.logical_and(i == 0, j == 0))
        def _init():
            acc_ref[...] = jnp.zeros_like(acc_ref)

        # Stream native-dtype tiles, upcast on-chip.
        x = logits_ref[...].astype(jnp.float32)
        y = targets_ref[...].astype(jnp.float32)
        # Numerically-stable BCEWithLogits (same formulation as PyTorch):
        #   max(x, 0) - x*y + log1p(exp(-|x|))
        bce = jnp.maximum(x, 0.0) - x * y + jnp.log1p(jnp.exp(-jnp.abs(x)))

        def _accumulate(vals):
            if acc_rows == 8:
                # vreg-aligned VALU adds only; sublane reduce deferred to
                # the epilogue, cross-lane reduce deferred to the wrapper.
                acc_ref[...] += jnp.sum(vals.reshape(TM // 8, 8, TN), axis=0)
            else:
                acc_ref[...] += jnp.sum(vals, axis=0, keepdims=True)

        if need_mask:
            rows_left = B - row_block(c, i, j) * TM
            cols_left = N - col_block(c, i, j) * TN
            conds = []
            if need_row_mask:
                conds.append(rows_left < TM)
            if need_col_mask:
                conds.append(cols_left < TN)
            is_edge = conds[0] if len(conds) == 1 else jnp.logical_or(*conds)

            @pl.when(jnp.logical_not(is_edge))
            def _interior():
                _accumulate(bce)

            @pl.when(is_edge)
            def _edge():
                masked = bce
                if need_row_mask:
                    rmask = lax.broadcasted_iota(jnp.int32, (TM, 1), 0) < rows_left
                    masked = jnp.where(rmask, masked, 0.0)
                if need_col_mask:
                    cmask = lax.broadcasted_iota(jnp.int32, (1, TN), 1) < cols_left
                    masked = jnp.where(cmask, masked, 0.0)
                _accumulate(masked)
        else:
            _accumulate(bce)

        @pl.when(jnp.logical_and(i == gm_c - 1, j == gn_c - 1))
        def _finalize():
            # Per-split lane-dense partial sums; final reduce + scaling in XLA.
            if acc_rows == 8:
                out_ref[...] = jnp.sum(acc_ref[...], axis=0, keepdims=True)
            else:
                out_ref[...] = acc_ref[...]

    return loss_kernel


def classification_loss(logits, targets, recursive_params,
                        parent_idx, child_idx,
                        recursive_penalty, recursive_constraint=True):
    """Pure-JAX wrapper: fused Pallas BCE reduction + tiny JAX regularizer."""
    assert logits.ndim == 2 and logits.shape == targets.shape
    B, N = logits.shape

    # Tile selection: either full-dim (always legal) or an (8,128)-aligned tile.
    TM = B if B <= _TM_PREF else _TM_PREF
    TN = N if N <= _TN_PREF else _TN_PREF
    grid_m = pl.cdiv(B, TM)
    grid_n = pl.cdiv(N, TN)

    # Two-way split of the tile grid across the leading "parallel" axis
    # (v7x has 2 TensorCores).  Only split when it divides exactly so there
    # are never ghost tiles (wasted HBM traffic on 1-TC chips).
    if grid_m >= 2 and grid_m % 2 == 0:
        C, gm_c, gn_c = 2, grid_m // 2, grid_n
        row_block = lambda c, i, j: c * (grid_m // 2) + i
        col_block = lambda c, i, j: j
    elif grid_n >= 2 and grid_n % 2 == 0:
        C, gm_c, gn_c = 2, grid_m, grid_n // 2
        row_block = lambda c, i, j: i
        col_block = lambda c, i, j: c * (grid_n // 2) + j
    else:
        C, gm_c, gn_c = 1, grid_m, grid_n
        row_block = lambda c, i, j: i
        col_block = lambda c, i, j: j

    need_row_mask = (B % TM) != 0
    need_col_mask = (N % TN) != 0
    acc_rows = 8 if TM % 8 == 0 else 1   # tiny-B fallback: (1, TN) accumulator

    kernel = _make_loss_kernel(
        B=B, N=N, TM=TM, TN=TN, gm_c=gm_c, gn_c=gn_c, acc_rows=acc_rows,
        need_row_mask=need_row_mask, need_col_mask=need_col_mask,
        row_block=row_block, col_block=col_block)

    in_map = lambda c, i, j: (row_block(c, i, j), col_block(c, i, j))
    grid_spec = pltpu.PrefetchScalarGridSpec(
        num_scalar_prefetch=0,
        grid=(C, gm_c, gn_c),
        in_specs=[
            pl.BlockSpec((TM, TN), in_map),          # logits tile
            pl.BlockSpec((TM, TN), in_map),          # targets tile
        ],
        out_specs=pl.BlockSpec((1, TN), lambda c, i, j: (c, 0)),
        scratch_shapes=[pltpu.VMEM((acc_rows, TN), jnp.float32)],
    )

    partials = pl.pallas_call(
        kernel,
        out_shape=jax.ShapeDtypeStruct((C, TN), jnp.float32),
        grid_spec=grid_spec,
        compiler_params=pltpu.CompilerParams(
            dimension_semantics=("parallel", "arbitrary", "arbitrary"),
            vmem_limit_bytes=32 * 1024 * 1024,
        ),
    )(logits, targets)

    # Final cross-lane/cross-split reduce + mean scaling in XLA (tiny).
    loss = jnp.sum(partials) / jnp.float32(B * N)

    # Recursive regularization: O(P * hidden) -- plain JAX, static gather.
    use_reg = bool(recursive_constraint) and int(np.size(parent_idx)) > 0
    if use_reg:
        p = jnp.take(recursive_params.astype(jnp.float32),
                     jnp.asarray(parent_idx, jnp.int32), axis=0)
        ch = jnp.take(recursive_params.astype(jnp.float32),
                      jnp.asarray(child_idx, jnp.int32), axis=0)
        rec = 0.5 * jnp.sum((p - ch) ** 2)
        loss = loss + jnp.float32(recursive_penalty) * rec
    return loss


# ---------------------------------------------------------------------------
# Pure-JAX reference (mirrors the PyTorch forward) for sanity checking.
# ---------------------------------------------------------------------------
def _reference(logits, targets, params, parent_idx, child_idx, penalty):
    x = logits.astype(jnp.float32)
    y = targets.astype(jnp.float32)
    bce = jnp.maximum(x, 0.0) - x * y + jnp.log1p(jnp.exp(-jnp.abs(x)))
    bce_mean = jnp.mean(bce)
    if np.size(parent_idx) > 0:
        p = jnp.take(params.astype(jnp.float32), jnp.asarray(parent_idx), axis=0)
        c = jnp.take(params.astype(jnp.float32), jnp.asarray(child_idx), axis=0)
        rec = 0.5 * jnp.sum((p - c) ** 2)
    else:
        rec = 0.0
    return bce_mean + penalty * rec


def _check(name, loss, ref, rtol, atol):
    loss = np.asarray(jax.block_until_ready(loss))
    ref = np.asarray(ref)
    assert np.allclose(loss, ref, rtol=rtol, atol=atol), (name, loss, ref)


if __name__ == "__main__":
    recursive_penalty = 1e-4
    relations = get_hierarchy_relations_synthetic(8)
    parent_idx, child_idx = _flatten_relations(relations)

    key = jax.random.PRNGKey(0)

    # --- Case 1: tiny shapes (matches the module docstring scales) ----------
    batch, num_labels, hidden = 2, 8, 32
    k1, k2, k3, key = jax.random.split(key, 4)
    logits = jax.random.normal(k1, (batch, num_labels), jnp.float32)
    targets = (jax.random.uniform(k2, (batch, num_labels)) > 0.5).astype(jnp.float32)
    params = jax.random.normal(k3, (num_labels, hidden), jnp.float32) * 0.1

    loss = classification_loss(logits, targets, params, parent_idx, child_idx,
                               recursive_penalty, recursive_constraint=True)
    ref = _reference(logits, targets, params, parent_idx, child_idx,
                     recursive_penalty)
    _check("tiny_f32", loss, ref, rtol=1e-5, atol=1e-5)

    # --- Case 2: multi-tile grid, column split + edge masking ---------------
    batch, num_labels, hidden = 520, 2300, 32
    k1, k2, k3, key = jax.random.split(key, 4)
    logits = jax.random.normal(k1, (batch, num_labels), jnp.float32)
    targets = (jax.random.uniform(k2, (batch, num_labels)) > 0.5).astype(jnp.float32)
    params = jax.random.normal(k3, (num_labels, hidden), jnp.float32) * 0.1

    loss = classification_loss(logits, targets, params, parent_idx, child_idx,
                               recursive_penalty, recursive_constraint=True)
    ref = _reference(logits, targets, params, parent_idx, child_idx,
                     recursive_penalty)
    _check("tiled_split_masked_f32", loss, ref, rtol=1e-4, atol=1e-5)

    # --- Case 3: multi-tile with row split, exact tiles, f32 ----------------
    batch, num_labels, hidden = 1024, 4096, 32
    k1, k2, k3, key = jax.random.split(key, 4)
    logits = jax.random.normal(k1, (batch, num_labels), jnp.float32)
    targets = (jax.random.uniform(k2, (batch, num_labels)) > 0.5).astype(jnp.float32)
    params = jax.random.normal(k3, (num_labels, hidden), jnp.float32) * 0.1

    loss = classification_loss(logits, targets, params, parent_idx, child_idx,
                               recursive_penalty, recursive_constraint=True)
    ref = _reference(logits, targets, params, parent_idx, child_idx,
                     recursive_penalty)
    _check("tiled_row_split_f32", loss, ref, rtol=1e-4, atol=1e-5)

    # --- Case 4: native bf16 inputs (no wrapper upcast), no constraint ------
    batch, num_labels, hidden = 64, 512, 32
    k1, k2, k3, key = jax.random.split(key, 4)
    logits = jax.random.normal(k1, (batch, num_labels), jnp.float32).astype(jnp.bfloat16)
    targets = (jax.random.uniform(k2, (batch, num_labels)) > 0.5).astype(jnp.bfloat16)
    params = jax.random.normal(k3, (num_labels, hidden), jnp.float32) * 0.1

    loss = classification_loss(logits, targets, params, parent_idx, child_idx,
                               recursive_penalty, recursive_constraint=False)
    ref = _reference(logits, targets, params,
                     np.zeros((0,), np.int32), np.zeros((0,), np.int32), 0.0)
    _check("bf16_no_constraint", loss, ref, rtol=1e-4, atol=1e-5)

    print("KERNEL_OK")
</pallas_src>

<mosaic_0001>
module attributes {stable_mosaic.version = 11 : i64} {
  func.func @loss_kernel(%arg0: i32, %arg1: i32, %arg2: i32, %arg3: memref<2x8xf32, #tpu.memory_space<vmem>>, %arg4: memref<2x8xf32, #tpu.memory_space<vmem>>, %arg5: memref<1x8xf32, #tpu.memory_space<vmem>>, %arg6: memref<1x8xf32, #tpu.memory_space<vmem>>) attributes {dimension_semantics = [#tpu.dimension_semantics<parallel>, #tpu.dimension_semantics<arbitrary>, #tpu.dimension_semantics<arbitrary>], iteration_bounds = array<i64: 1, 1, 1>, scalar_prefetch = 0 : i64, scratch_operands = 1 : i64, tpu.core_type = #tpu.core_type<tc>, window_params = [{transform_indices = @transform_0, window_bounds = array<i64: 2, 8>}, {transform_indices = @transform_1, window_bounds = array<i64: 2, 8>}, {transform_indices = @transform_2, window_bounds = array<i64: 1, 8>}]} {
    %c0_i32 = arith.constant 0 : i32
    %0 = arith.cmpi eq, %arg1, %c0_i32 : i32
    %c0_i32_0 = arith.constant 0 : i32
    %1 = arith.cmpi eq, %arg2, %c0_i32_0 : i32
    %2 = arith.andi %0, %1 : i1
    %3 = arith.extui %2 : i1 to i32
    %c0_i32_1 = arith.constant 0 : i32
    %4 = arith.cmpi ne, %3, %c0_i32_1 : i32
    scf.if %4 {
      %cst_14 = arith.constant 0.000000e+00 : f32
      %27 = vector.broadcast %cst_14 : f32 to vector<1x8xf32>
      %c0_15 = arith.constant 0 : index
      %c0_16 = arith.constant 0 : index
      %28 = vector.load %arg6[%c0_15, %c0_16] : memref<1x8xf32, #tpu.memory_space<vmem>>, vector<1x8xf32>
      tpu.vector_store %arg6[%c0_15, %c0_16], %27 {strides = array<i32>} : memref<1x8xf32, #tpu.memory_space<vmem>>, vector<1x8xf32>,
    } else {
    }
    %c0 = arith.constant 0 : index
    %c0_2 = arith.constant 0 : index
    %5 = vector.load %arg3[%c0, %c0_2] : memref<2x8xf32, #tpu.memory_space<vmem>>, vector<2x8xf32>
    %c0_3 = arith.constant 0 : index
    %c0_4 = arith.constant 0 : index
    %6 = vector.load %arg4[%c0_3, %c0_4] : memref<2x8xf32, #tpu.memory_space<vmem>>, vector<2x8xf32>
    %cst = arith.constant 0.000000e+00 : f32
    %7 = vector.broadcast %cst : f32 to vector<2x8xf32>
    %8 = arith.maximumf %5, %7 : vector<2x8xf32>
    %9 = arith.mulf %5, %6 : vector<2x8xf32>
    %10 = arith.subf %8, %9 : vector<2x8xf32>
    %11 = math.absf %5 : vector<2x8xf32>
    %cst_5 = arith.constant 0.000000e+00 : f32
    %12 = vector.broadcast %cst_5 : f32 to vector<2x8xf32>
    %13 = arith.subf %12, %11 : vector<2x8xf32>
    %14 = math.exp %13 : vector<2x8xf32>
    %15 = math.log1p %14 : vector<2x8xf32>
    %16 = arith.addf %10, %15 : vector<2x8xf32>
    %c0_6 = arith.constant 0 : index
    %c0_7 = arith.constant 0 : index
    %17 = vector.load %arg6[%c0_6, %c0_7] : memref<1x8xf32, #tpu.memory_space<vmem>>, vector<1x8xf32>
    %cst_8 = arith.constant dense<0.000000e+00> : vector<8xf32>
    %18 = vector.multi_reduction <add>, %16, %cst_8 [0] : vector<2x8xf32> to vector<8xf32>
    %19 = vector.shape_cast %18 : vector<8xf32> to vector<1x8xf32>
    %20 = arith.addf %17, %19 : vector<1x8xf32>
    %c0_9 = arith.constant 0 : index
    %c0_10 = arith.constant 0 : index
    %21 = vector.load %arg6[%c0_9, %c0_10] : memref<1x8xf32, #tpu.memory_space<vmem>>, vector<1x8xf32>
    tpu.vector_store %arg6[%c0_9, %c0_10], %20 {strides = array<i32>} : memref<1x8xf32, #tpu.memory_space<vmem>>, vector<1x8xf32>,
    %c0_i32_11 = arith.constant 0 : i32
    %22 = arith.cmpi eq, %arg1, %c0_i32_11 : i32
    %c0_i32_12 = arith.constant 0 : i32
    %23 = arith.cmpi eq, %arg2, %c0_i32_12 : i32
    %24 = arith.andi %22, %23 : i1
    %25 = arith.extui %24 : i1 to i32
    %c0_i32_13 = arith.constant 0 : i32
    %26 = arith.cmpi ne, %25, %c0_i32_13 : i32
    scf.if %26 {
      %c0_14 = arith.constant 0 : index
      %c0_15 = arith.constant 0 : index
      %27 = vector.load %arg6[%c0_14, %c0_15] : memref<1x8xf32, #tpu.memory_space<vmem>>, vector<1x8xf32>
      %c0_16 = arith.constant 0 : index
      %c0_17 = arith.constant 0 : index
      %28 = vector.load %arg5[%c0_16, %c0_17] : memref<1x8xf32, #tpu.memory_space<vmem>>, vector<1x8xf32>
      tpu.vector_store %arg5[%c0_16, %c0_17], %27 {strides = array<i32>} : memref<1x8xf32, #tpu.memory_space<vmem>>, vector<1x8xf32>,
    } else {
    }
    return
  }
  func.func @transform_0(%arg0: i32, %arg1: i32, %arg2: i32) -> (i32, i32) {
    %c0_i32 = arith.constant 0 : i32
    return %arg1, %arg2 : i32, i32
  }
  func.func @transform_1(%arg0: i32, %arg1: i32, %arg2: i32) -> (i32, i32) {
    %c0_i32 = arith.constant 0 : i32
    return %arg1, %arg2 : i32, i32
  }
  func.func @transform_2(%arg0: i32, %arg1: i32, %arg2: i32) -> (i32, i32) {
    %c0_i32 = arith.constant 0 : i32
    %c0_i32_0 = arith.constant 0 : i32
    return %arg0, %c0_i32 : i32, i32
  }
}

</mosaic_0001>

<llo_original>
// kernel: tpu_custom_call.1
$region0: #{tpu_custom_call.1}
  #allocation0 [shape = 'u32[]', space=smem, size = 0x4, offset = 0x4, fixed_abs, tag = 'smem constant byte address 0x4 - core index']
  #allocation1 [shape = 'u32[144,128]{1,0:T(1,128)}', space=vmem, size = 0x12000, scoped, tag = 'internal scratch']
  #allocation2 [shape = 'f32[1,8]{1,0:T(1,128)}', space=vmem, size = 0x200, scoped, tag = 'scratch operand']
  %s0 = inlined_call_operand.hbm [shape: f32[2,8], index: 0, kind: input, shape index: {}]
  %s1 = inlined_call_operand.vmem [shape: f32[2,8], index: 1, kind: input, shape index: {}]
  %s2 = inlined_call_operand.hbm [shape: f32[1,8], index: 2, kind: output, shape index: {}]
  %s3 = sld [smem:[#allocation0]]
  $region30: #{tpu_custom_call.1} parent=0
    _
  %s5 = ssub.s32 1, %s3
  %s6 = scalar_select 0, %s5, %s3
  $region1: #{tpu_custom_call.1} parent=0
    #allocation3 [shape = 'u8[1024]{0}', space=vmem, size = 0x400, scoped, tag = 'input window, operand 0, single buffered']
    #allocation4 [shape = 's32[1]{0}', space=sflag, size = 0x4, scoped, tag = 'scoped memory for tpu_custom_call.1']
    #allocation5 [shape = 's32[1]{0}', space=sflag, size = 0x4, scoped, tag = 'scoped memory for tpu_custom_call.1']
    #allocation6 [shape = 'u8[512]{0}', space=vmem, size = 0x400, scoped, tag = 'output window, operand 0, single buffered']
    %7 = vsyncpa [#allocation4], 0
    %8 = vsyncpa [#allocation5], 0
    // Predicated region
    $region2: #{tpu_custom_call.1} parent=1 // pred_check
      _
    $region3: #{tpu_custom_call.1} parent=1 // pred_check_branch
      %10 = sbr.rel (0) target = $region5
    $region4: #{tpu_custom_call.1} parent=1 // pred_region
      %s12 = ssub.s32 32, 32
      %13 = vsyncadd [#allocation4], %s12
      %s15 = sshll.u32 [#allocation3], 4
      %s16 = int_to_ptr.vmem [resolvable:$true] %s15
      %18 = dma.hbm_to_vmem [thread:$0]  %s0, 32, %s16, [#allocation4]
    $region5: #{tpu_custom_call.1} parent=1 // pred_fallthru
      _
    // Predicated region
    $region6: #{tpu_custom_call.1} parent=1 // pred_check
      _
    $region7: #{tpu_custom_call.1} parent=1 // pred_check_branch
      %20 = sbr.rel (0) target = $region9
    $region8: #{tpu_custom_call.1} parent=1 // pred_region
      _
    $region9: #{tpu_custom_call.1} parent=1 // pred_fallthru
      _
    // Predicated region
    $region10: #{tpu_custom_call.1} parent=1 // pred_check
      _
    $region11: #{tpu_custom_call.1} parent=1 // pred_check_branch
      %22 = sbr.rel (0) target = $region13
    $region12: #{tpu_custom_call.1} parent=1 // pred_region
      %23 = dma.done [#allocation4], 32
    $region13: #{tpu_custom_call.1} parent=1 // pred_fallthru
      _
    %p24 = scmp.eq.s32.totalorder 0, 0
    %p25 = scmp.eq.s32.totalorder 0, 0
    %p26 = pnand %p24, %p25
    %p27 = pneg %p26
    // Predicated region
    $region14: #{tpu_custom_call.1} parent=1 // pred_check
      _
    $region15: #{tpu_custom_call.1} parent=1 // pred_check_branch
      %29 = sbr.rel (%p26) target = $region17
    $region16: #{tpu_custom_call.1} parent=1 // pred_region
      %vm30 = vcmask 57344
      %31 = vst.msk [vmem:[#allocation2] sm:$0x1] %vm30, 0.0
    $region17: #{tpu_custom_call.1} parent=1 // pred_fallthru
      _
    %v32 = vld [vmem:[#allocation3] sm:$0x3]
    %v33 = vld [vmem:[%s1] sm:$0x3]
    %v34 = vmax.f32 %v32, 0.0
    %v35 = vmul.f32 %v32, %v33
    %v36 = vsub.f32 %v34, %v35
    %v37 = vand.u32 2147483647, %v32
    %v38 = vsub.f32 0.0, %v37
    %v39 = vmul.f32 %v38, 1.442695
    %v40 = vpow.pop %v39
    %v41 = vadd.f32 %v40, 1.0
    %v42 = vlog2.pop %v41
    %v43 = vmul.f32 %v42, 0.6931472
    %v44 = vmul.f32 -0.5, %v40
    %v45 = vadd.f32 %v44, 1.0
    %v46 = vmul.f32 %v45, %v40
    %v47 = vand.u32 2147483647, %v40
    %vm48 = vcmp.lt.f32.partialorder %v47, 0.0004427343
    %v49 = vsel %vm48, %v46, %v43
    %v50 = vadd.f32 %v36, %v49
    %v51 = vld [vmem:[#allocation2] sm:$0x1]
    %vm52 = vcmask 58368
    %v53 = vsel %vm52, %v50, 0.0
    %v54 = vrot.slane %v53, 4
    %v55 = vadd.f32 %v53, %v54
    %v56 = vrot.slane %v55, 2
    %v57 = vadd.f32 %v55, %v56
    %v58 = vrot.slane %v57, 1
    %v59 = vadd.f32 %v57, %v58
    %v60 = vadd.f32 %v51, %v59
    %vm61 = vcmask 57344
    %62 = vst.msk [vmem:[#allocation2] sm:$0x1] %vm61, %v60
    // Predicated region
    $region18: #{tpu_custom_call.1} parent=1 // pred_check
      _
    $region19: #{tpu_custom_call.1} parent=1 // pred_check_branch
      %64 = sbr.rel (%p26) target = $region21
    $region20: #{tpu_custom_call.1} parent=1 // pred_region
      %v65 = vld [vmem:[#allocation2] sm:$0x1]
      %66 = vst.msk [vmem:[#allocation6] sm:$0x1] %vm61, %v65
    $region21: #{tpu_custom_call.1} parent=1 // pred_fallthru
      _
    // Predicated region
    $region22: #{tpu_custom_call.1} parent=1 // pred_check
      _
    $region23: #{tpu_custom_call.1} parent=1 // pred_check_branch
      %68 = sbr.rel (0) target = $region25
    $region24: #{tpu_custom_call.1} parent=1 // pred_region
      %s70 = ssub.s32 16, 16
      %71 = vsyncadd [#allocation5], %s70
      %s73 = sshll.u32 [#allocation6], 4
      %s74 = int_to_ptr.vmem [resolvable:$true] %s73
      %76 = dma.vmem_to_hbm [thread:$0]  %s74, 16, %s2, [#allocation5]
    $region25: #{tpu_custom_call.1} parent=1 // pred_fallthru
      _
    // Predicated region
    $region26: #{tpu_custom_call.1} parent=1 // pred_check
      _
    $region27: #{tpu_custom_call.1} parent=1 // pred_check_branch
      %78 = sbr.rel (0) target = $region29
    $region28: #{tpu_custom_call.1} parent=1 // pred_region
      %79 = dma.done [#allocation5], 16
    $region29: #{tpu_custom_call.1} parent=1 // pred_fallthru
      _
    %80 = vsyncpa [#allocation4], 1
    %81 = vsyncpa [#allocation5], 1

</llo_original>
